<compile_context>
chip_gen: v7x
topology: tpu7x:2x2x1
jax: 0.10.0
libtpu: 0.0.40
codegen_flags: <defaults>
</compile_context>

<pallas_src>
import jax
import jax.numpy as jnp
from jax import lax
from jax.experimental import pallas as pl
from jax.experimental.pallas import tpu as pltpu


def gru_scan_kernel(gi_ref, mask_ref, whh_ref, bhh_ref, out_ref, h_ref):
    """Sequential GRU over time, everything resident in VMEM.

    gi_ref   : (T, B, 3H) precomputed input-side gate pre-activations (incl. b_ih)
    mask_ref : (T, B, 1)  1.0 while t < lengths[b], else 0.0
    whh_ref  : (H, 3H)    hidden-to-hidden weights, gates [r | z | n] along columns
    bhh_ref  : (1, 3H)    hidden-to-hidden bias
    out_ref  : (T, B, H)  zero-padded rnn_out
    h_ref    : (B, H)     VMEM scratch carrying the hidden state across timesteps
    """
    H = h_ref.shape[1]
    nt = gi_ref.shape[0]
    h_ref[...] = jnp.zeros_like(h_ref)

    def step(t, carry):
        h = h_ref[...]                                   # (B, H)
        gi = gi_ref[t]                                   # (B, 3H) — already includes b_ih
        # Single fused hidden-side matmul for all three gates.
        gh = jnp.dot(h, whh_ref[...],
                     preferred_element_type=jnp.float32) + bhh_ref[...]   # (B, 3H)

        r = jax.nn.sigmoid(gi[:, 0:H] + gh[:, 0:H])
        z = jax.nn.sigmoid(gi[:, H:2 * H] + gh[:, H:2 * H])
        n = jnp.tanh(gi[:, 2 * H:3 * H] + r * gh[:, 2 * H:3 * H])
        h_new = (1.0 - z) * n + z * h

        m = mask_ref[t]                                  # (B, 1), values in {0.0, 1.0}
        h_next = m * h_new + (1.0 - m) * h               # freeze hidden past the length
        h_ref[...] = h_next
        out_ref[t] = (m * h_next).astype(out_ref.dtype)  # pad_packed_sequence zero-padding
        return carry

    lax.fori_loop(0, nt, step, 0)


def proj_kernel(x_ref, w_ref, b_ref, o_ref):
    """Batched output projection: (T*B, H) @ (H, V) + b — one MXU-friendly GEMM."""
    o_ref[...] = (jnp.dot(x_ref[...], w_ref[...],
                          preferred_element_type=jnp.float32)
                  + b_ref[...]).astype(o_ref.dtype)


def decoder_forward(tokens, lengths, params):
    """tokens: (T, B) int32, lengths: (B,) int32 sorted descending, lengths[0] == T."""
    T, B = tokens.shape
    H = params["w_hh"].shape[0]
    V = params["w_out"].shape[1]

    # --- glue (XLA): fold Embedding + W_ih + b_ih into one gather table -----
    gate_table = jnp.dot(params["embedding"], params["w_ih"],
                         preferred_element_type=jnp.float32) + params["b_ih"]   # (vocab, 3H)
    gi = jnp.take(gate_table, tokens, axis=0)                                   # (T, B, 3H)

    # mask[t, b] = 1.0 while t < lengths[b] (pack/pad semantics).
    mask = (jnp.arange(T, dtype=jnp.int32)[:, None]
            < lengths.astype(jnp.int32)[None, :]).astype(jnp.float32)[:, :, None]  # (T, B, 1)

    # --- Pallas: full recurrence in a single kernel invocation ---------------
    rnn_out = pl.pallas_call(
        gru_scan_kernel,
        out_shape=jax.ShapeDtypeStruct((T, B, H), jnp.float32),
        in_specs=[
            pl.BlockSpec(memory_space=pltpu.MemorySpace.VMEM),   # gi (T, B, 3H)
            pl.BlockSpec(memory_space=pltpu.MemorySpace.VMEM),   # mask (T, B, 1)
            pl.BlockSpec(memory_space=pltpu.MemorySpace.VMEM),   # W_hh (H, 3H)
            pl.BlockSpec(memory_space=pltpu.MemorySpace.VMEM),   # b_hh (1, 3H)
        ],
        out_specs=pl.BlockSpec(memory_space=pltpu.MemorySpace.VMEM),
        scratch_shapes=[pltpu.VMEM((B, H), jnp.float32)],        # hidden state carry
    )(gi, mask, params["w_hh"], params["b_hh"])

    # --- Pallas: hoisted output projection as one batched GEMM ---------------
    out_flat = pl.pallas_call(
        proj_kernel,
        out_shape=jax.ShapeDtypeStruct((T * B, V), jnp.float32),
        in_specs=[
            pl.BlockSpec(memory_space=pltpu.MemorySpace.VMEM),   # rnn_out (T*B, H)
            pl.BlockSpec(memory_space=pltpu.MemorySpace.VMEM),   # W_out (H, V)
            pl.BlockSpec(memory_space=pltpu.MemorySpace.VMEM),   # b_out (1, V)
        ],
        out_specs=pl.BlockSpec(memory_space=pltpu.MemorySpace.VMEM),
    )(rnn_out.reshape(T * B, H), params["w_out"], params["b_out"])

    return out_flat.reshape(T, B, V)


def init_params(key, num_embeddings, embedding_dim, hidden_size):
    V, E, H = num_embeddings, embedding_dim, hidden_size
    ks = jax.random.split(key, 7)
    s = 1.0 / jnp.sqrt(H)
    emb_table = jax.random.normal(ks[0], (V, E), jnp.float32).at[0].set(0.0)  # padding_idx=0
    return {
        "embedding": emb_table,
        # Fused gate layout: columns are [r | z | n] (PyTorch GRU gate order).
        "w_ih": jax.random.uniform(ks[1], (E, 3 * H), jnp.float32, -s, s),
        "w_hh": jax.random.uniform(ks[2], (H, 3 * H), jnp.float32, -s, s),
        "b_ih": jax.random.uniform(ks[3], (1, 3 * H), jnp.float32, -s, s),
        "b_hh": jax.random.uniform(ks[4], (1, 3 * H), jnp.float32, -s, s),
        "w_out": jax.random.uniform(ks[5], (H, V), jnp.float32, -s, s),
        "b_out": jax.random.uniform(ks[6], (1, V), jnp.float32, -s, s),
    }


def reference_forward(tokens, lengths, params):
    """Pure-JAX reference reproducing the PyTorch Decoder semantics."""
    emb = jnp.take(params["embedding"], tokens, axis=0)        # (T, B, E)
    T, B, _ = emb.shape
    H = params["w_hh"].shape[0]
    wih, whh = params["w_ih"], params["w_hh"]
    bih, bhh = params["b_ih"], params["b_hh"]

    def step(h, inp):
        x, t = inp
        gi = x @ wih + bih
        gh = h @ whh + bhh
        r = jax.nn.sigmoid(gi[:, 0:H] + gh[:, 0:H])
        z = jax.nn.sigmoid(gi[:, H:2 * H] + gh[:, H:2 * H])
        n = jnp.tanh(gi[:, 2 * H:3 * H] + r * gh[:, 2 * H:3 * H])
        h_new = (1.0 - z) * n + z * h
        m = (t < lengths)[:, None]
        h_next = jnp.where(m, h_new, h)
        return h_next, jnp.where(m, h_next, 0.0)

    _, rnn_out = lax.scan(step, jnp.zeros((B, H), jnp.float32),
                          (emb, jnp.arange(T, dtype=jnp.int32)))
    return rnn_out @ params["w_out"] + params["b_out"]


if __name__ == "__main__":
    # Shapes consistent with Decoder(num_embeddings=32, embedding_dim=16, hidden_size=32)
    VOCAB, E, H = 32, 16, 32
    T, B = 8, 2

    key = jax.random.PRNGKey(0)
    kp, kt = jax.random.split(key)
    params = init_params(kp, VOCAB, E, H)

    tokens = jax.random.randint(kt, (T, B), 0, VOCAB, dtype=jnp.int32)   # (T, B) seq-first
    lengths = jnp.array([T, 5], dtype=jnp.int32)                          # sorted descending
    assert int(lengths[0]) == T, "pack_padded_sequence requires sorted lengths with max == T"

    out = decoder_forward(tokens, lengths, params)
    out = jax.block_until_ready(out)

    ref = reference_forward(tokens, lengths, params)
    assert out.shape == (T, B, VOCAB)
    assert jnp.allclose(out, ref, atol=1e-5, rtol=1e-5), "mismatch vs pure-JAX reference"

    print("KERNEL_OK")
</pallas_src>

<mosaic_0001>
module attributes {stable_mosaic.version = 11 : i64} {
  func.func @gru_scan_kernel(%arg0: memref<8x2x96xf32, #tpu.memory_space<vmem>>, %arg1: memref<8x2x1xf32, #tpu.memory_space<vmem>>, %arg2: memref<32x96xf32, #tpu.memory_space<vmem>>, %arg3: memref<1x96xf32, #tpu.memory_space<vmem>>, %arg4: memref<8x2x32xf32, #tpu.memory_space<vmem>>, %arg5: memref<2x32xf32, #tpu.memory_space<vmem>>) attributes {dimension_semantics = [], scalar_prefetch = 0 : i64, scratch_operands = 1 : i64, tpu.core_type = #tpu.core_type<tc>} {
    %cst = arith.constant 0.000000e+00 : f32
    %0 = vector.broadcast %cst : f32 to vector<2x32xf32>
    %c0 = arith.constant 0 : index
    %c0_0 = arith.constant 0 : index
    %1 = vector.load %arg5[%c0, %c0_0] : memref<2x32xf32, #tpu.memory_space<vmem>>, vector<2x32xf32>
    tpu.vector_store %arg5[%c0, %c0_0], %0 {strides = array<i32>} : memref<2x32xf32, #tpu.memory_space<vmem>>, vector<2x32xf32>,
    %c0_i32 = arith.constant 0 : i32
    %c8_i32 = arith.constant 8 : i32
    %2 = arith.addi %c0_i32, %c8_i32 : i32
    %c1_i32 = arith.constant 1 : i32
    scf.for %arg6 = %c0_i32 to %2 step %c1_i32  : i32 {
      %c0_2 = arith.constant 0 : index
      %c0_3 = arith.constant 0 : index
      %3 = vector.load %arg5[%c0_2, %c0_3] : memref<2x32xf32, #tpu.memory_space<vmem>>, vector<2x32xf32>
      %4 = arith.index_cast %arg6 : i32 to index
      %c0_4 = arith.constant 0 : index
      %c0_5 = arith.constant 0 : index
      %5 = vector.load %arg0[%4, %c0_4, %c0_5] : memref<8x2x96xf32, #tpu.memory_space<vmem>>, vector<1x2x96xf32>
      %6 = vector.shape_cast %5 : vector<1x2x96xf32> to vector<2x96xf32>
      %c0_6 = arith.constant 0 : index
      %c0_7 = arith.constant 0 : index
      %7 = vector.load %arg2[%c0_6, %c0_7] : memref<32x96xf32, #tpu.memory_space<vmem>>, vector<32x96xf32>
      %cst_8 = arith.constant dense<0.000000e+00> : vector<2x96xf32>
      %8 = tpu.matmul %3, %7, %cst_8 {dimension_numbers = #tpu.dot_dimension_numbers<[1], [0], [0], [1], [0, 0, 1, 1], [], []>} : vector<2x32xf32>, vector<32x96xf32>, vector<2x96xf32> -> vector<2x96xf32>
      %c0_9 = arith.constant 0 : index
      %c0_10 = arith.constant 0 : index
      %9 = vector.load %arg3[%c0_9, %c0_10] : memref<1x96xf32, #tpu.memory_space<vmem>>, vector<1x96xf32>
      %10 = vector.broadcast %9 : vector<1x96xf32> to vector<2x96xf32>
      %11 = arith.addf %8, %10 : vector<2x96xf32>
      %12 = vector.extract_strided_slice %6 {offsets = [0, 0], sizes = [2, 32], strides = [1, 1]} : vector<2x96xf32> to vector<2x32xf32>
      %13 = vector.extract_strided_slice %11 {offsets = [0, 0], sizes = [2, 32], strides = [1, 1]} : vector<2x96xf32> to vector<2x32xf32>
      %14 = arith.addf %12, %13 : vector<2x32xf32>
      %15 = arith.negf %14 : vector<2x32xf32>
      %16 = math.exp %15 : vector<2x32xf32>
      %cst_11 = arith.constant 1.000000e+00 : f32
      %17 = vector.broadcast %cst_11 : f32 to vector<2x32xf32>
      %18 = arith.addf %17, %16 : vector<2x32xf32>
      %19 = arith.divf %17, %18 : vector<2x32xf32>
      %20 = vector.extract_strided_slice %6 {offsets = [0, 32], sizes = [2, 32], strides = [1, 1]} : vector<2x96xf32> to vector<2x32xf32>
      %21 = vector.extract_strided_slice %11 {offsets = [0, 32], sizes = [2, 32], strides = [1, 1]} : vector<2x96xf32> to vector<2x32xf32>
      %22 = arith.addf %20, %21 : vector<2x32xf32>
      %23 = arith.negf %22 : vector<2x32xf32>
      %24 = math.exp %23 : vector<2x32xf32>
      %cst_12 = arith.constant 1.000000e+00 : f32
      %25 = vector.broadcast %cst_12 : f32 to vector<2x32xf32>
      %26 = arith.addf %25, %24 : vector<2x32xf32>
      %27 = arith.divf %25, %26 : vector<2x32xf32>
      %28 = vector.extract_strided_slice %6 {offsets = [0, 64], sizes = [2, 32], strides = [1, 1]} : vector<2x96xf32> to vector<2x32xf32>
      %29 = vector.extract_strided_slice %11 {offsets = [0, 64], sizes = [2, 32], strides = [1, 1]} : vector<2x96xf32> to vector<2x32xf32>
      %30 = arith.mulf %19, %29 : vector<2x32xf32>
      %31 = arith.addf %28, %30 : vector<2x32xf32>
      %32 = math.tanh %31 : vector<2x32xf32>
      %cst_13 = arith.constant 1.000000e+00 : f32
      %33 = vector.broadcast %cst_13 : f32 to vector<2x32xf32>
      %34 = arith.subf %33, %27 : vector<2x32xf32>
      %35 = arith.mulf %34, %32 : vector<2x32xf32>
      %36 = arith.mulf %27, %3 : vector<2x32xf32>
      %37 = arith.addf %35, %36 : vector<2x32xf32>
      %38 = arith.index_cast %arg6 : i32 to index
      %c0_14 = arith.constant 0 : index
      %c0_15 = arith.constant 0 : index
      %39 = vector.load %arg1[%38, %c0_14, %c0_15] : memref<8x2x1xf32, #tpu.memory_space<vmem>>, vector<1x2x1xf32>
      %40 = vector.shape_cast %39 : vector<1x2x1xf32> to vector<2x1xf32>
      %41 = vector.broadcast %40 : vector<2x1xf32> to vector<2x32xf32>
      %42 = arith.mulf %41, %37 : vector<2x32xf32>
      %cst_16 = arith.constant 1.000000e+00 : f32
      %43 = vector.broadcast %cst_16 : f32 to vector<2x1xf32>
      %44 = arith.subf %43, %40 : vector<2x1xf32>
      %45 = vector.broadcast %44 : vector<2x1xf32> to vector<2x32xf32>
      %46 = arith.mulf %45, %3 : vector<2x32xf32>
      %47 = arith.addf %42, %46 : vector<2x32xf32>
      %c0_17 = arith.constant 0 : index
      %c0_18 = arith.constant 0 : index
      %48 = vector.load %arg5[%c0_17, %c0_18] : memref<2x32xf32, #tpu.memory_space<vmem>>, vector<2x32xf32>
      tpu.vector_store %arg5[%c0_17, %c0_18], %47 {strides = array<i32>} : memref<2x32xf32, #tpu.memory_space<vmem>>, vector<2x32xf32>,
      %49 = vector.broadcast %40 : vector<2x1xf32> to vector<2x32xf32>
      %50 = arith.mulf %49, %47 : vector<2x32xf32>
      %51 = arith.index_cast %arg6 : i32 to index
      %c0_19 = arith.constant 0 : index
      %c0_20 = arith.constant 0 : index
      %52 = vector.load %arg4[%51, %c0_19, %c0_20] : memref<8x2x32xf32, #tpu.memory_space<vmem>>, vector<1x2x32xf32>
      %53 = vector.shape_cast %52 : vector<1x2x32xf32> to vector<2x32xf32>
      %54 = vector.shape_cast %50 : vector<2x32xf32> to vector<1x2x32xf32>
      tpu.vector_store %arg4[%51, %c0_19, %c0_20], %54 {strides = array<i32>} : memref<8x2x32xf32, #tpu.memory_space<vmem>>, vector<1x2x32xf32>,
    }
    %c8_i32_1 = arith.constant 8 : i32
    return
  }
}

</mosaic_0001>

<llo_original>
// kernel: tpu_custom_call.1
$region0: #{tpu_custom_call.1}
  #allocation0 [shape = 'u32[]', space=smem, size = 0x4, offset = 0x4, fixed_abs, tag = 'smem constant byte address 0x4 - core index']
  #allocation1 [shape = 'u32[144,128]{1,0:T(1,128)}', space=vmem, size = 0x12000, scoped, tag = 'internal scratch']
  #allocation2 [shape = 'f32[2,32]{1,0:T(2,128)}', space=vmem, size = 0x400, scoped, tag = 'scratch operand']
  %s0 = inlined_call_operand.vmem [shape: f32[8,2,96], index: 0, kind: input, shape index: {}]
  %s1 = inlined_call_operand.vmem [shape: f32[8,2,1], index: 1, kind: input, shape index: {}]
  %s2 = inlined_call_operand.hbm [shape: f32[32,96], index: 2, kind: input, shape index: {}]
  %s3 = inlined_call_operand.vmem [shape: f32[1,96], index: 3, kind: input, shape index: {}]
  %s4 = inlined_call_operand.hbm [shape: f32[8,2,32], index: 4, kind: output, shape index: {}]
  %s5 = sld [smem:[#allocation0]]
  $region37: #{tpu_custom_call.1} parent=0
    _
  %s7 = ssub.s32 1, %s5
  %s8 = scalar_select 0, %s7, %s5
  $region1: #{tpu_custom_call.1} parent=0
    #allocation3 [shape = 'u8[16384]{0}', space=vmem, size = 0x4000, scoped, tag = 'input window, operand 2, single buffered']
    #allocation4 [shape = 's32[1]{0}', space=sflag, size = 0x4, scoped, tag = 'scoped memory for tpu_custom_call.1']
    #allocation5 [shape = 's32[1]{0}', space=sflag, size = 0x4, scoped, tag = 'scoped memory for tpu_custom_call.1']
    #allocation6 [shape = 'u8[8192]{0}', space=vmem, size = 0x2000, scoped, tag = 'output window, operand 0, single buffered']
    %9 = vsyncpa [#allocation4], 0
    %10 = vsyncpa [#allocation5], 0
    // Predicated region
    $region2: #{tpu_custom_call.1} parent=1 // pred_check
      _
    $region3: #{tpu_custom_call.1} parent=1 // pred_check_branch
      %12 = sbr.rel (0) target = $region5
    $region4: #{tpu_custom_call.1} parent=1 // pred_region
      _
    $region5: #{tpu_custom_call.1} parent=1 // pred_fallthru
      _
    // Predicated region
    $region6: #{tpu_custom_call.1} parent=1 // pred_check
      _
    $region7: #{tpu_custom_call.1} parent=1 // pred_check_branch
      %14 = sbr.rel (0) target = $region9
    $region8: #{tpu_custom_call.1} parent=1 // pred_region
      _
    $region9: #{tpu_custom_call.1} parent=1 // pred_fallthru
      _
    // Predicated region
    $region10: #{tpu_custom_call.1} parent=1 // pred_check
      _
    $region11: #{tpu_custom_call.1} parent=1 // pred_check_branch
      %16 = sbr.rel (0) target = $region13
    $region12: #{tpu_custom_call.1} parent=1 // pred_region
      %s18 = ssub.s32 512, 512
      %19 = vsyncadd [#allocation4], %s18
      %s20 = sshll.u32 [#allocation3], 4
      %s21 = int_to_ptr.vmem [resolvable:$true] %s20
      %26 = dma.hbm_to_vmem [thread:$0]  %s2, 512, %s21, [#allocation4], 128, 128, 8
    $region13: #{tpu_custom_call.1} parent=1 // pred_fallthru
      _
    // Predicated region
    $region14: #{tpu_custom_call.1} parent=1 // pred_check
      _
    $region15: #{tpu_custom_call.1} parent=1 // pred_check_branch
      %28 = sbr.rel (0) target = $region17
    $region16: #{tpu_custom_call.1} parent=1 // pred_region
      _
    $region17: #{tpu_custom_call.1} parent=1 // pred_fallthru
      _
    // Predicated region
    $region18: #{tpu_custom_call.1} parent=1 // pred_check
      _
    $region19: #{tpu_custom_call.1} parent=1 // pred_check_branch
      %30 = sbr.rel (0) target = $region21
    $region20: #{tpu_custom_call.1} parent=1 // pred_region
      %31 = dma.done [#allocation4], 512
    $region21: #{tpu_custom_call.1} parent=1 // pred_fallthru
      _
    %vm32 = vcmask 254976
    %33 = vst.msk [vmem:[#allocation2] sm:$0x3] %vm32, 0.0
    loop: start=0, step=1, limit=8
    $region22: #{tpu_custom_call.1} parent=1 // loop_pre_header
      _
    $region23: #{tpu_custom_call.1} parent=1 // loop_header
      %s35 = sphi 0, %s39
      %p36 = scmp.ge.s32.totalorder %s35, 8
    $region24: #{tpu_custom_call.1} parent=1 // loop_header_branch
      %38 = sbr.rel (%p36) target = $region28
    $region25: #{tpu_custom_call.1} parent=1 // loop_body
      %v40 = vld [vmem:[#allocation2] sm:$0x3]
      %s41 = smul.u32 %s35, 2
      %s42 = scalar_lea.vmem %s0, %s41
      %v43 = vld [vmem:[%s42] sm:$0x3]
      %v44 = vld [vmem:[#allocation3] sm:$0xff]
      %v45 = vld [vmem:[#allocation3 + $0x8] sm:$0xff]
      %v46 = vld [vmem:[#allocation3 + $0x10] sm:$0xff]
      %v47 = vld [vmem:[#allocation3 + $0x18] sm:$0xff]
      %v48 = vld [vmem:[%s3] sm:$0x1]
      %v50 = vlaneseq
      %v51 = vshrl.u32 %v50, 7
      %v52 = vsub.s32 0, %v51
      %v53 = vrot.slane %v48, %v52
      %vm55 = vcmask 261120
      %v57 = vsel %vm55, %v40, 0
      %59 = vmatprep.subr.mxu0 0.0
      %60 = vmatpush1.msra.mxu0 %v44
      %61 = vmatprep.subr.mxu0 0.0
      %62 = vmatpush1.msra.mxu0 %v45
      %63 = vmatprep.subr.mxu0 0.0
      %64 = vmatpush1.msra.mxu0 %v46
      %65 = vmatprep.subr.mxu0 0.0
      %66 = vmatpush1.msra.mxu0 %v47
      %67 = vmatprep.subr.mxu0 0.0
      %68 = vmatpush1.msra.mxu0 0.0
      %69 = vmatprep.subr.mxu0 0.0
      %70 = vmatpush1.msra.mxu0 0.0
      %71 = vmatprep.subr.mxu0 0.0
      %72 = vmatpush1.msra.mxu0 0.0
      %73 = vmatprep.subr.mxu0 0.0
      %74 = vmatpush1.msra.mxu0 0.0
      %75 = vmatprep.subr.mxu0 0.0
      %76 = vmatpush1.msra.mxu0 0.0
      %77 = vmatprep.subr.mxu0 0.0
      %78 = vmatpush1.msra.mxu0 0.0
      %79 = vmatprep.subr.mxu0 0.0
      %80 = vmatpush1.msra.mxu0 0.0
      %81 = vmatprep.subr.mxu0 0.0
      %82 = vmatpush1.msra.mxu0 0.0
      %83 = vmatprep.subr.mxu0 0.0
      %84 = vmatpush1.msra.mxu0 0.0
      %85 = vmatprep.subr.mxu0 0.0
      %86 = vmatpush1.msra.mxu0 0.0
      %87 = vmatprep.subr.mxu0 0.0
      %88 = vmatpush1.msra.mxu0 0.0
      %89 = vmatprep.subr.mxu0 0.0
      %90 = vmatpush1.msra.mxu0 0.0
      %91 = vmatprep.subr.mxu0 0.0
      %92 = vmatpush1.msra.mxu0 0.0
      %93 = vmatprep.subr.mxu0 0.0
      %94 = vmatpush1.msra.mxu0 0.0
      %95 = vmatprep.subr.mxu0 0.0
      %96 = vmatpush1.msra.mxu0 0.0
      %97 = vmatprep.subr.mxu0 0.0
      %98 = vmatpush1.msra.mxu0 0.0
      %99 = vmatprep.subr.mxu0 0.0
      %100 = vmatpush1.msra.mxu0 0.0
      %101 = vmatprep.subr.mxu0 0.0
      %102 = vmatpush1.msra.mxu0 0.0
      %103 = vmatprep.subr.mxu0 0.0
      %104 = vmatpush1.msra.mxu0 0.0
      %105 = vmatprep.subr.mxu0 0.0
      %106 = vmatpush1.msra.mxu0 0.0
      %107 = vmatprep.subr.mxu0 0.0
      %108 = vmatpush1.msra.mxu0 0.0
      %109 = vmatprep.subr.mxu0 0.0
      %110 = vmatpush1.msra.mxu0 0.0
      %111 = vmatprep.subr.mxu0 0.0
      %112 = vmatpush1.msra.mxu0 0.0
      %113 = vmatprep.subr.mxu0 0.0
      %114 = vmatpush1.msra.mxu0 0.0
      %115 = vmatprep.subr.mxu0 0.0
      %116 = vmatpush1.msra.mxu0 0.0
      %117 = vmatprep.subr.mxu0 0.0
      %118 = vmatpush1.msra.mxu0 0.0
      %119 = vmatprep.subr.mxu0 0.0
      %120 = vmatpush1.msra.mxu0 0.0
      %121 = vmatprep.subr.mxu0 0.0
      %122 = vmatpush1.msra.mxu0 0.0
      %123 = vmatprep.mubr.f32.mxu0 0.0
      %124 = vmatmul.mubr.f32.gmra.mrb[0].mxu0 %v57
      %v125 = vpop.f32.mrb[0].mxu0
      %v126 = vadd.f32 %v53, %v125
      %v127 = vpop.f32.mrb[0].mxu0
      %128 = vdwg.mxu0
      %v129 = vadd.f32 %v43, %v126
      %v130 = vxor.u32 %v129, 2147483648
      %v131 = vmul.f32 %v130, 1.442695
      %v132 = vpow.pop %v131
      %v133 = vadd.f32 %v132, 1.0
      %v134 = vrcp.pop %v133
      %v135 = vmul.f32 1.0, %v134
      %137 = vrot.lane.b32.xlu0 %v126, 64
      %v138 = vpop.permute.xlu0 %137
      %v140 = vmul.f32 %v135, %v138
      %142 = vrot.lane.b32.xlu0 %v140, 64
      %v143 = vpop.permute.xlu0 %142
      %v145 = vadd.f32 %v43, %v143
      %v146 = vtanh.pop %v145
      %v147 = vsub.f32 1.0, %v135
      %149 = vrot.lane.b32.xlu0 %v146, 96
      %v150 = vpop.permute.xlu0 %149
      %v152 = vmul.f32 %v147, %v150
      %153 = vrot.lane.b32.xlu0 %v40, 32
      %v154 = vpop.permute.xlu0 %153
      %v156 = vmul.f32 %v135, %v154
      %v157 = vadd.f32 %v152, %v156
      %s158 = scalar_lea.vmem %s1, %s41
      %v159 = vld [vmem:[%s158] sm:$0x3]
      %161 = vset.pattern.permute.xlu0 0
      %162 = vperm.xlu0 %161, %v159
      %v163 = vpop.permute.xlu0 %162
      %v165 = vmul.f32 %v163, %v157
      %v166 = vsub.f32 1.0, %v159
      %168 = vset.pattern.permute.xlu0 0
      %169 = vperm.xlu0 %168, %v166
      %v170 = vpop.permute.xlu0 %169
      %v172 = vmul.f32 %v170, %v40
      %174 = vrot.lane.b32.xlu0 %v172, 32
      %v175 = vpop.permute.xlu0 %174
      %v177 = vadd.f32 %v165, %v175
      %179 = vrot.lane.b32.xlu0 %v177, 96
      %v180 = vpop.permute.xlu0 %179
      %182 = vst.msk [vmem:[#allocation2] sm:$0x3] %vm32, %v180
      %v183 = vmul.f32 %v163, %v177
      %185 = vrot.lane.b32.xlu0 %v183, 96
      %v186 = vpop.permute.xlu0 %185
      %s188 = scalar_lea.vmem [#allocation6], %s41
      %189 = vst.msk [vmem:[%s188] sm:$0x3] %vm32, %v186
    $region26: #{tpu_custom_call.1} parent=1 // loop_footer
      %s39 = sadd.s32 1, %s35
    $region27: #{tpu_custom_call.1} parent=1 // loop_footer_branch
      %34 = sbr.rel target = $region23
    $region28: #{tpu_custom_call.1} parent=1 // loop_exit
      _
    // Predicated region
    $region29: #{tpu_custom_call.1} parent=1 // pred_check
      _
    $region30: #{tpu_custom_call.1} parent=1 // pred_check_branch
      %191 = sbr.rel (0) target = $region32
    $region31: #{tpu_custom_call.1} parent=1 // pred_region
      %s193 = ssub.s32 256, 256
      %194 = vsyncadd [#allocation5], %s193
      %s195 = sshll.u32 [#allocation6], 4
      %s196 = int_to_ptr.vmem [resolvable:$true] %s195
      %201 = dma.vmem_to_hbm [thread:$0]  %s196, 256, %s4, [#allocation5], 32, 32, 2
    $region32: #{tpu_custom_call.1} parent=1 // pred_fallthru
      _
    // Predicated region
    $region33: #{tpu_custom_call.1} parent=1 // pred_check
      _
    $region34: #{tpu_custom_call.1} parent=1 // pred_check_branch
      %203 = sbr.rel (0) target = $region36
    $region35: #{tpu_custom_call.1} parent=1 // pred_region
      %204 = dma.done [#allocation5], 256
    $region36: #{tpu_custom_call.1} parent=1 // pred_fallthru
      _
    %205 = vsyncpa [#allocation4], 1
    %206 = vsyncpa [#allocation5], 1

</llo_original>
